<compile_context>
chip_gen: v7x
topology: tpu7x:2x2x1
jax: 0.10.0
libtpu: 0.0.40
codegen_flags: <defaults>
</compile_context>

<pallas_src>
import jax
import jax.numpy as jnp
from jax.experimental import pallas as pl
from jax.experimental.pallas import tpu as pltpu


def add_one_kernel(x_ref, o_ref):
    # Pure scalar path: one SMEM load, one scalar-ALU add, one SMEM store.
    # x_ref and o_ref alias (input_output_aliases), which is safe here since
    # the single read happens before the single write.
    o_ref[0] = x_ref[0] + 1.0


def add_one(x):
    """Computes x + 1 via a Pallas TPU kernel. `x` is a 0-D f32 array."""
    x1 = x.reshape(1)  # 0-D -> (1,): metadata-only bitcast in HLO
    out = pl.pallas_call(
        add_one_kernel,
        out_shape=jax.ShapeDtypeStruct((1,), x1.dtype),
        in_specs=[pl.BlockSpec(memory_space=pltpu.MemorySpace.SMEM)],
        out_specs=pl.BlockSpec(memory_space=pltpu.MemorySpace.SMEM),
        # Output aliases the input buffer: no separate 4-byte HBM output
        # allocation / copy around the custom call.
        input_output_aliases={0: 0},
        # Trivial cost hint so XLA schedules freely around the custom call.
        cost_estimate=pl.CostEstimate(flops=1, transcendentals=0,
                                      bytes_accessed=8),
    )(x1)
    return out.reshape(())  # back to 0-D scalar, matching the PyTorch module


if __name__ == "__main__":
    key = jax.random.PRNGKey(0)
    # Module is called with a scalar tensor (x = torch.tensor(1.0)).
    x = jax.random.normal(key, (), dtype=jnp.float32)
    y = add_one(x)
    jax.block_until_ready(y)
    expected = x + 1.0
    assert y.shape == (), y.shape
    assert jnp.allclose(y, expected), (y, expected)
    print("KERNEL_OK")
</pallas_src>

<mosaic_0001>
module attributes {stable_mosaic.version = 11 : i64} {
  func.func @add_one_kernel(%arg0: memref<1xf32, #tpu.memory_space<smem>>, %arg1: memref<1xf32, #tpu.memory_space<smem>>) attributes {dimension_semantics = [], scalar_prefetch = 0 : i64, scratch_operands = 0 : i64, tpu.core_type = #tpu.core_type<tc>} {
    %c0 = arith.constant 0 : index
    %0 = memref.load %arg0[%c0] : memref<1xf32, #tpu.memory_space<smem>>
    %cst = arith.constant 1.000000e+00 : f32
    %1 = arith.addf %0, %cst : f32
    %c0_0 = arith.constant 0 : index
    %2 = memref.load %arg1[%c0_0] : memref<1xf32, #tpu.memory_space<smem>>
    memref.store %1, %arg1[%c0_0] : memref<1xf32, #tpu.memory_space<smem>>
    return
  }
}

</mosaic_0001>

<llo_original>
// kernel: tpu_custom_call.1
$region0: #{tpu_custom_call.1}
  #allocation0 [shape = 'u32[]', space=smem, size = 0x4, offset = 0x4, fixed_abs, tag = 'smem constant byte address 0x4 - core index']
  #allocation1 [shape = 'u32[144,128]{1,0:T(1,128)}', space=vmem, size = 0x12000, scoped, tag = 'internal scratch']
  #allocation2 [shape = 'f32[1]{0:T(128)S(6)}', space=smem, size = 0x200, scoped, tag = 'scoped memory for tpu_custom_call.1']
  %s0 = inlined_call_operand.<no memory space> [shape: f32[1], index: 0, kind: input, shape index: {}, may-alias: {0,1}]
  %s1 = inlined_call_operand.hbm [shape: f32[1], index: 1, kind: output, shape index: {}, may-alias: {0,1}]
  %s2 = sld [smem:[#allocation0]]
  $region14: #{tpu_custom_call.1} parent=0
    _
  %s4 = ssub.s32 1, %s2
  %s5 = scalar_select 0, %s4, %s2
  %6 = sst [smem:[#allocation2]] %s0
  $region1: #{tpu_custom_call.1} parent=0
    #allocation3 [shape = 'u8[512]{0}', space=smem, size = 0x200, scoped, tag = 'output window, operand 0, single buffered']
    #allocation4 [shape = 's32[1]{0}', space=sflag, size = 0x4, scoped, tag = 'scoped memory for tpu_custom_call.1']
    %7 = vsyncpa [#allocation4], 0
    // Predicated region
    $region2: #{tpu_custom_call.1} parent=1 // pred_check
      _
    $region3: #{tpu_custom_call.1} parent=1 // pred_check_branch
      %9 = sbr.rel (0) target = $region5
    $region4: #{tpu_custom_call.1} parent=1 // pred_region
      _
    $region5: #{tpu_custom_call.1} parent=1 // pred_fallthru
      _
    %s10 = sld [smem:[#allocation2]]
    %s11 = sadd.f32 %s10, 1.0
    %s12 = scalar_lea.smem [#allocation3], 0
    %13 = sst [smem:[%s12]] %s11
    // Predicated region
    $region6: #{tpu_custom_call.1} parent=1 // pred_check
      _
    $region7: #{tpu_custom_call.1} parent=1 // pred_check_branch
      %15 = sbr.rel (0) target = $region9
    $region8: #{tpu_custom_call.1} parent=1 // pred_region
      %s17 = ssub.s32 16, 16
      %18 = vsyncadd [#allocation4], %s17
      %21 = dma.smem_to_hbm [#allocation3], 16, %s1, [#allocation4]
    $region9: #{tpu_custom_call.1} parent=1 // pred_fallthru
      _
    // Predicated region
    $region10: #{tpu_custom_call.1} parent=1 // pred_check
      _
    $region11: #{tpu_custom_call.1} parent=1 // pred_check_branch
      %23 = sbr.rel (0) target = $region13
    $region12: #{tpu_custom_call.1} parent=1 // pred_region
      %24 = dma.done [#allocation4], 16
    $region13: #{tpu_custom_call.1} parent=1 // pred_fallthru
      _
    %25 = sfence
    %26 = vsyncpa [#allocation4], 1

</llo_original>
